<compile_context>
chip_gen: v7x
topology: tpu7x:2x2x1
jax: 0.10.0
libtpu: 0.0.40
codegen_flags: <defaults>
</compile_context>

<pallas_src>
import jax
import jax.numpy as jnp
import numpy as np
from jax.experimental import pallas as pl
from jax.experimental.pallas import tpu as pltpu


def _bayesian_linear_kernel(x_ref,      # (B, D_in_aug)         VMEM, resident across grid
                            wmu_ref,    # (D_in_aug, D_out_p)   VMEM, resident (mu^T, bias row appended)
                            wsig_ref,   # (D_in_aug, D_out_p)   VMEM, resident (sigma^T, bias row appended)
                            eps_ref,    # (D_in_aug, D_out_p)   per-sample noise block
                            o_ref):     # (B, D_out_p)          output block for sample s
    # Reparameterization: W = mu + sigma * eps (bias included as the augmented row).
    w = wmu_ref[...] + wsig_ref[...] * eps_ref[...]
    # F.linear with the weight already transposed + bias folded in: x_aug @ W_aug  (MXU, f32 acc).
    o_ref[...] = jnp.dot(x_ref[...], w,
                         preferred_element_type=jnp.float32).astype(o_ref.dtype)


def bayesian_layer_forward(x, weight_mu, weight_logsigma,
                           bias_mu=None, bias_logsigma=None,
                           *, key, num_samples=1):
    """Returns (num_samples, B, D_out): num_samples Monte-Carlo forward samples."""
    B, D_in = x.shape
    D_out = weight_mu.shape[0]
    D_out_p = ((D_out + 127) // 128) * 128                  # lane-dense output width
    D_in_aug = (((D_in + 1) + 7) // 8) * 8                  # +1 bias row, sublane-aligned

    # exp(logsigma) once, outside the per-sample loop.
    sigma_w = jnp.exp(weight_logsigma)
    if bias_mu is None:                                     # bias=False -> contribution is exactly 0
        bias_mu = jnp.zeros((D_out,), jnp.float32)
        sigma_b = jnp.zeros((D_out,), jnp.float32)
    else:
        sigma_b = jnp.exp(bias_logsigma)

    # Augmented, pre-transposed, zero-padded parameter layout.
    #   row [0:D_in]  -> weight (transposed)
    #   row [D_in]    -> bias
    #   rows/cols beyond that are zero (mu=0, sigma=0) so sampled pad values are exactly 0.
    wmu_aug = (jnp.zeros((D_in_aug, D_out_p), jnp.float32)
               .at[:D_in, :D_out].set(weight_mu.T)
               .at[D_in, :D_out].set(bias_mu))
    wsig_aug = (jnp.zeros((D_in_aug, D_out_p), jnp.float32)
                .at[:D_in, :D_out].set(sigma_w.T)
                .at[D_in, :D_out].set(sigma_b))

    # Augmented input: [x | 1 | 0...] so the bias row of W_aug is added per sample.
    x_aug = (jnp.zeros((B, D_in_aug), jnp.float32)
             .at[:, :D_in].set(x.astype(jnp.float32))
             .at[:, D_in].set(1.0))

    # One host-side draw for all samples; the pad rows/cols are killed by sigma=0.
    eps = jax.random.normal(key, (num_samples, D_in_aug, D_out_p), dtype=jnp.float32)

    out = pl.pallas_call(
        _bayesian_linear_kernel,
        out_shape=jax.ShapeDtypeStruct((num_samples, B, D_out_p), x.dtype),
        grid_spec=pltpu.PrefetchScalarGridSpec(
            num_scalar_prefetch=0,
            grid=(num_samples,),
            in_specs=[
                pl.BlockSpec((B, D_in_aug), lambda s: (0, 0)),              # x_aug (resident)
                pl.BlockSpec((D_in_aug, D_out_p), lambda s: (0, 0)),        # W_mu^T aug (resident)
                pl.BlockSpec((D_in_aug, D_out_p), lambda s: (0, 0)),        # W_sigma^T aug (resident)
                pl.BlockSpec((None, D_in_aug, D_out_p), lambda s: (s, 0, 0)),  # eps[s] (pipelined)
            ],
            out_specs=pl.BlockSpec((None, B, D_out_p), lambda s: (s, 0, 0)),
        ),
        compiler_params=pltpu.CompilerParams(
            dimension_semantics=("parallel",)),
    )(x_aug, wmu_aug, wsig_aug, eps)

    return out[:, :, :D_out], eps


if __name__ == "__main__":
    input_dim, output_dim = 32, 48          # BayesianLayer(32, 48)
    sigma = 0.00075                         # module default posterior sigma
    batch = 4
    num_samples = 128                       # MC samples amortized in one pallas_call

    key = jax.random.PRNGKey(0)
    kx, km, kb, keps = jax.random.split(key, 4)
    x = jax.random.normal(kx, (batch, input_dim), dtype=jnp.float32)
    # Non-trivial posterior means; logsigma exactly as the module initializes it: log(sigma)*ones.
    weight_mu = 0.5 * jax.random.normal(km, (output_dim, input_dim), dtype=jnp.float32)
    weight_logsigma = jnp.full((output_dim, input_dim), float(np.log(sigma)), jnp.float32)
    bias_mu = 0.5 * jax.random.normal(kb, (output_dim,), dtype=jnp.float32)
    bias_logsigma = jnp.full((output_dim,), float(np.log(sigma)), jnp.float32)

    out, eps = bayesian_layer_forward(x, weight_mu, weight_logsigma,
                                      bias_mu, bias_logsigma,
                                      key=keps, num_samples=num_samples)
    out = np.asarray(jax.block_until_ready(out))
    assert out.shape == (num_samples, batch, output_dim)

    # --- Correctness check: exact pure-JAX/numpy reference with the SAME eps --------------
    eps_np = np.asarray(eps)
    xn = np.asarray(x)
    wmu = np.asarray(weight_mu)
    bmu = np.asarray(bias_mu)
    sw = np.exp(np.asarray(weight_logsigma))
    sb = np.exp(np.asarray(bias_logsigma))

    ref = np.empty((num_samples, batch, output_dim), np.float32)
    for s in range(num_samples):
        eps_w = eps_np[s, :input_dim, :output_dim].T            # (D_out, D_in)
        eps_b = eps_np[s, input_dim, :output_dim]                # (D_out,)
        w_s = wmu + sw * eps_w
        b_s = bmu + sb * eps_b
        ref[s] = xn @ w_s.T + b_s

    np.testing.assert_allclose(out, ref, rtol=2e-2, atol=2e-2)
    assert float(np.abs(out - out[0:1]).max()) > 0.0, "samples do not vary"

    print("KERNEL_OK")
</pallas_src>

<mosaic_0001>
module attributes {stable_mosaic.version = 11 : i64} {
  func.func @_bayesian_linear_kernel(%arg0: i32, %arg1: memref<4x40xf32, #tpu.memory_space<vmem>>, %arg2: memref<40x128xf32, #tpu.memory_space<vmem>>, %arg3: memref<40x128xf32, #tpu.memory_space<vmem>>, %arg4: memref<1x40x128xf32, #tpu.memory_space<vmem>>, %arg5: memref<1x4x128xf32, #tpu.memory_space<vmem>>) attributes {dimension_semantics = [#tpu.dimension_semantics<parallel>], iteration_bounds = array<i64: 128>, scalar_prefetch = 0 : i64, scratch_operands = 0 : i64, tpu.core_type = #tpu.core_type<tc>, window_params = [{pipeline_mode = #tpu.pipeline_mode<synchronous>, transform_indices = @transform_0, window_bounds = array<i64: 4, 40>}, {pipeline_mode = #tpu.pipeline_mode<synchronous>, transform_indices = @transform_1, window_bounds = array<i64: 40, 128>}, {pipeline_mode = #tpu.pipeline_mode<synchronous>, transform_indices = @transform_2, window_bounds = array<i64: 40, 128>}, {transform_indices = @transform_3, window_bounds = array<i64: 1, 40, 128>}, {transform_indices = @transform_4, window_bounds = array<i64: 1, 4, 128>}]} {
    %c0 = arith.constant 0 : index
    %c0_0 = arith.constant 0 : index
    %0 = vector.load %arg2[%c0, %c0_0] : memref<40x128xf32, #tpu.memory_space<vmem>>, vector<40x128xf32>
    %c0_1 = arith.constant 0 : index
    %c0_2 = arith.constant 0 : index
    %1 = vector.load %arg3[%c0_1, %c0_2] : memref<40x128xf32, #tpu.memory_space<vmem>>, vector<40x128xf32>
    %c0_3 = arith.constant 0 : index
    %c0_4 = arith.constant 0 : index
    %c0_5 = arith.constant 0 : index
    %2 = vector.load %arg4[%c0_3, %c0_4, %c0_5] : memref<1x40x128xf32, #tpu.memory_space<vmem>>, vector<1x40x128xf32>
    %3 = vector.shape_cast %2 : vector<1x40x128xf32> to vector<40x128xf32>
    %4 = arith.mulf %1, %3 : vector<40x128xf32>
    %5 = arith.addf %0, %4 : vector<40x128xf32>
    %c0_6 = arith.constant 0 : index
    %c0_7 = arith.constant 0 : index
    %6 = vector.load %arg1[%c0_6, %c0_7] : memref<4x40xf32, #tpu.memory_space<vmem>>, vector<4x40xf32>
    %cst = arith.constant dense<0.000000e+00> : vector<4x128xf32>
    %7 = tpu.matmul %6, %5, %cst {dimension_numbers = #tpu.dot_dimension_numbers<[1], [0], [0], [1], [0, 0, 1, 1], [], []>} : vector<4x40xf32>, vector<40x128xf32>, vector<4x128xf32> -> vector<4x128xf32>
    %c0_8 = arith.constant 0 : index
    %c0_9 = arith.constant 0 : index
    %c0_10 = arith.constant 0 : index
    %8 = vector.load %arg5[%c0_8, %c0_9, %c0_10] : memref<1x4x128xf32, #tpu.memory_space<vmem>>, vector<1x4x128xf32>
    %9 = vector.shape_cast %8 : vector<1x4x128xf32> to vector<4x128xf32>
    %10 = vector.shape_cast %7 : vector<4x128xf32> to vector<1x4x128xf32>
    tpu.vector_store %arg5[%c0_8, %c0_9, %c0_10], %10 {strides = array<i32>} : memref<1x4x128xf32, #tpu.memory_space<vmem>>, vector<1x4x128xf32>,
    return
  }
  func.func @transform_0(%arg0: i32) -> (i32, i32) {
    %c0_i32 = arith.constant 0 : i32
    %c0_i32_0 = arith.constant 0 : i32
    %c0_i32_1 = arith.constant 0 : i32
    return %c0_i32, %c0_i32_0 : i32, i32
  }
  func.func @transform_1(%arg0: i32) -> (i32, i32) {
    %c0_i32 = arith.constant 0 : i32
    %c0_i32_0 = arith.constant 0 : i32
    %c0_i32_1 = arith.constant 0 : i32
    return %c0_i32, %c0_i32_0 : i32, i32
  }
  func.func @transform_2(%arg0: i32) -> (i32, i32) {
    %c0_i32 = arith.constant 0 : i32
    %c0_i32_0 = arith.constant 0 : i32
    %c0_i32_1 = arith.constant 0 : i32
    return %c0_i32, %c0_i32_0 : i32, i32
  }
  func.func @transform_3(%arg0: i32) -> (i32, i32, i32) {
    %c0_i32 = arith.constant 0 : i32
    %c0_i32_0 = arith.constant 0 : i32
    %c0_i32_1 = arith.constant 0 : i32
    return %arg0, %c0_i32, %c0_i32_0 : i32, i32, i32
  }
  func.func @transform_4(%arg0: i32) -> (i32, i32, i32) {
    %c0_i32 = arith.constant 0 : i32
    %c0_i32_0 = arith.constant 0 : i32
    %c0_i32_1 = arith.constant 0 : i32
    return %arg0, %c0_i32, %c0_i32_0 : i32, i32, i32
  }
}

</mosaic_0001>

<llo_original>
// kernel: tpu_custom_call.1
$region0: #{tpu_custom_call.1}
  #allocation0 [shape = 'u32[]', space=smem, size = 0x4, offset = 0x4, fixed_abs, tag = 'smem constant byte address 0x4 - core index']
  #allocation1 [shape = 'u32[144,128]{1,0:T(1,128)}', space=vmem, size = 0x12000, scoped, tag = 'internal scratch']
  %s0 = inlined_call_operand.hbm [shape: f32[4,40], index: 0, kind: input, shape index: {}]
  %s1 = inlined_call_operand.hbm [shape: f32[40,128], index: 1, kind: input, shape index: {}]
  %s2 = inlined_call_operand.hbm [shape: f32[40,128], index: 2, kind: input, shape index: {}]
  %s3 = inlined_call_operand.hbm [shape: f32[128,40,128], index: 3, kind: input, shape index: {}]
  %s4 = inlined_call_operand.hbm [shape: f32[128,4,128], index: 4, kind: output, shape index: {}]
  %s5 = sld [smem:[#allocation0]]
  $region65: #{tpu_custom_call.1} parent=0
    _
  %s7 = ssub.s32 1, %s5
  %s8 = scalar_select 0, %s7, %s5
  $region1: #{tpu_custom_call.1} parent=0
    #allocation2 [shape = 'u8[2048]{0}', space=vmem, size = 0x800, scoped, tag = 'input window, operand 0, single buffered']
    #allocation3 [shape = 's32[2]{0}', space=sflag, size = 0x8, scoped, tag = 'scoped memory for tpu_custom_call.1']
    #allocation4 [shape = 's32[2]{0}', space=sflag, size = 0x8, scoped, tag = 'scoped memory for tpu_custom_call.1']
    #allocation5 [shape = 'u8[20480]{0}', space=vmem, size = 0x5000, scoped, tag = 'input window, operand 1, single buffered']
    #allocation6 [shape = 's32[1]{0}', space=sflag, size = 0x4, scoped, tag = 'scoped memory for tpu_custom_call.1']
    #allocation7 [shape = 'u8[20480]{0}', space=vmem, size = 0x5000, scoped, tag = 'input window, operand 2, single buffered']
    #allocation8 [shape = 'u8[40960]{0}', space=vmem, size = 0xa000, scoped, tag = 'input window, operand 3']
    #allocation9 [shape = 's32[2]{0}', space=sflag, size = 0x8, scoped, tag = 'scoped memory for tpu_custom_call.1']
    #allocation10 [shape = 'u8[4096]{0}', space=vmem, size = 0x1000, scoped, tag = 'output window, operand 0']
    %9 = vsyncpa [#allocation3], 0
    %10 = vsyncpa [#allocation6], 0
    %11 = vsyncpa [#allocation9], 0
    %s12 = scalar_lea.sflag [#allocation9], 1
    %13 = vsyncpa %s12, 0
    %14 = vsyncpa [#allocation4], 0
    %s15 = scalar_lea.sflag [#allocation4], 1
    %16 = vsyncpa %s15, 0
    loop: start=0, step=1, limit=130
    $region2: #{tpu_custom_call.1} parent=1 // loop_pre_header
      _
    $region3: #{tpu_custom_call.1} parent=1 // loop_header
      %s18 = sphi 0, %s22
      %p19 = scmp.ge.s32.totalorder %s18, 130
      %s26 = sphi 0, %s26
      %s28 = sphi 0, %s26
      %s29 = sphi 0, %s28
      %s43 = sphi 0, %s29
      %s47 = sphi 0, %s47
      %s49 = sphi 0, %s47
      %s50 = sphi 0, %s49
      %s64 = sphi 0, %s50
      %s68 = sphi 0, %s68
      %s70 = sphi 0, %s68
      %s71 = sphi 0, %s70
      %s85 = sphi 0, %s71
      %s91 = sphi 0, %s93
      %s94 = sphi 0, %s91
      %s95 = sphi 0, %s94
      %s111 = sphi 0, %s95
      %s117 = sphi 0, %s119
      %s120 = sphi 0, %s117
      %s121 = sphi 0, %s120
      %s137 = sphi 0, %s121
    $region4: #{tpu_custom_call.1} parent=1 // loop_header_branch
      %21 = sbr.rel (%p19) target = $region8
    $region5: #{tpu_custom_call.1} parent=1 // loop_body
      %s23 = ssub.s32 %s18, 1
      %s24 = ssub.s32 %s18, 2
      %s25 = sadd.s32 %s18, 1
      %s27 = sadd.s32 %s26, 1
      %p30 = scmp.eq.s32.totalorder %s18, 127
      %p31 = scmp.ne.s32.totalorder %s26, %s28
      %p32 = scmp.eq.s32.totalorder %s18, 0
      %p33 = por %p31, %p32
      %p34 = scmp.ne.s32.totalorder %s26, %s28
      %p35 = scmp.eq.s32.totalorder %s23, 127
      %p36 = por %p34, %p35
      %p37 = scmp.ne.s32.totalorder %s28, %s29
      %p38 = scmp.eq.s32.totalorder %s23, 0
      %p39 = por %p37, %p38
      %p40 = scmp.ne.s32.totalorder %s28, %s29
      %p41 = scmp.eq.s32.totalorder %s24, 127
      %p42 = por %p40, %p41
      %p44 = scmp.ne.s32.totalorder %s29, %s43
      %p45 = scmp.eq.s32.totalorder %s24, 0
      %p46 = por %p44, %p45
      %s48 = sadd.s32 %s47, 1
      %p51 = scmp.eq.s32.totalorder %s18, 127
      %p52 = scmp.ne.s32.totalorder %s47, %s49
      %p53 = scmp.eq.s32.totalorder %s18, 0
      %p54 = por %p52, %p53
      %p55 = scmp.ne.s32.totalorder %s47, %s49
      %p56 = scmp.eq.s32.totalorder %s23, 127
      %p57 = por %p55, %p56
      %p58 = scmp.ne.s32.totalorder %s49, %s50
      %p59 = scmp.eq.s32.totalorder %s23, 0
      %p60 = por %p58, %p59
      %p61 = scmp.ne.s32.totalorder %s49, %s50
      %p62 = scmp.eq.s32.totalorder %s24, 127
      %p63 = por %p61, %p62
      %p65 = scmp.ne.s32.totalorder %s50, %s64
      %p66 = scmp.eq.s32.totalorder %s24, 0
      %p67 = por %p65, %p66
      %s69 = sadd.s32 %s68, 1
      %p72 = scmp.eq.s32.totalorder %s18, 127
      %p73 = scmp.ne.s32.totalorder %s68, %s70
      %p74 = scmp.eq.s32.totalorder %s18, 0
      %p75 = por %p73, %p74
      %p76 = scmp.ne.s32.totalorder %s68, %s70
      %p77 = scmp.eq.s32.totalorder %s23, 127
      %p78 = por %p76, %p77
      %p79 = scmp.ne.s32.totalorder %s70, %s71
      %p80 = scmp.eq.s32.totalorder %s23, 0
      %p81 = por %p79, %p80
      %p82 = scmp.ne.s32.totalorder %s70, %s71
      %p83 = scmp.eq.s32.totalorder %s24, 127
      %p84 = por %p82, %p83
      %p86 = scmp.ne.s32.totalorder %s71, %s85
      %p87 = scmp.eq.s32.totalorder %s24, 0
      %p88 = por %p86, %p87
      %s89 = ssub.s32 %s18, %s25
      %p90 = scmp.eq.s32.totalorder %s89, 0
      %s92 = sadd.s32 %s91, 1
      %s93 = scalar_select %p90, %s91, %s92
      %p96 = pneg %p90
      %p97 = scmp.eq.s32.totalorder %s18, 127
      %p98 = por %p96, %p97
      %p99 = scmp.ne.s32.totalorder %s91, %s94
      %p100 = scmp.eq.s32.totalorder %s18, 0
      %p101 = por %p99, %p100
      %p102 = scmp.ne.s32.totalorder %s91, %s94
      %p103 = scmp.eq.s32.totalorder %s23, 127
      %p104 = por %p102, %p103
      %p105 = scmp.ne.s32.totalorder %s94, %s95
      %p106 = scmp.eq.s32.totalorder %s23, 0
      %p107 = por %p105, %p106
      %p108 = scmp.ne.s32.totalorder %s94, %s95
      %p109 = scmp.eq.s32.totalorder %s24, 127
      %p110 = por %p108, %p109
      %p112 = scmp.ne.s32.totalorder %s95, %s111
      %p113 = scmp.eq.s32.totalorder %s24, 0
      %p114 = por %p112, %p113
      %s115 = ssub.s32 %s18, %s25
      %p116 = scmp.eq.s32.totalorder %s115, 0
      %s118 = sadd.s32 %s117, 1
      %s119 = scalar_select %p116, %s117, %s118
      %p122 = pneg %p116
      %p123 = scmp.eq.s32.totalorder %s18, 127
      %p124 = por %p122, %p123
      %p125 = scmp.ne.s32.totalorder %s117, %s120
      %p126 = scmp.eq.s32.totalorder %s18, 0
      %p127 = por %p125, %p126
      %p128 = scmp.ne.s32.totalorder %s117, %s120
      %p129 = scmp.eq.s32.totalorder %s23, 127
      %p130 = por %p128, %p129
      %p131 = scmp.ne.s32.totalorder %s120, %s121
      %p132 = scmp.eq.s32.totalorder %s23, 0
      %p133 = por %p131, %p132
      %p134 = scmp.ne.s32.totalorder %s120, %s121
      %p135 = scmp.eq.s32.totalorder %s24, 127
      %p136 = por %p134, %p135
      %p138 = scmp.ne.s32.totalorder %s121, %s137
      %p139 = scmp.eq.s32.totalorder %s24, 0
      %p140 = por %p138, %p139
      %p141 = scmp.le.s32.totalorder 1, %s18
      %p142 = scmp.lt.s32.totalorder %s18, 129
      %p143 = pnand %p141, %p142
      %p144 = pneg %p143
      // Predicated region
      $region9: #{tpu_custom_call.1} parent=5 // pred_check
        _
      $region10: #{tpu_custom_call.1} parent=5 // pred_check_branch
        %146 = sbr.rel (%p143) target = $region12
      $region11: #{tpu_custom_call.1} parent=5 // pred_region
        %s147 = ssub.s32 %s18, 1
        // Predicated region
        $region13: #{tpu_custom_call.1} parent=11 // pred_check
          %p148 = pneg %p39
        $region14: #{tpu_custom_call.1} parent=11 // pred_check_branch
          %150 = sbr.rel (%p148) target = $region16
        $region15: #{tpu_custom_call.1} parent=11 // pred_region
          %s152 = ssub.s32 64, 64
          %153 = vsyncadd [#allocation3], %s152
          %s155 = sshll.u32 [#allocation2], 4
          %s156 = int_to_ptr.vmem [resolvable:$true] %s155
          %158 = dma.hbm_to_vmem [thread:$0]  %s0, 64, %s156, [#allocation3]
        $region16: #{tpu_custom_call.1} parent=11 // pred_fallthru
          _
        // Predicated region
        $region17: #{tpu_custom_call.1} parent=11 // pred_check
          %p159 = pneg %p60
        $region18: #{tpu_custom_call.1} parent=11 // pred_check_branch
          %161 = sbr.rel (%p159) target = $region20
        $region19: #{tpu_custom_call.1} parent=11 // pred_region
          %s163 = ssub.s32 640, 640
          %164 = vsyncadd [#allocation6], %s163
          %s165 = sshll.u32 [#allocation5], 4
          %s166 = int_to_ptr.vmem [resolvable:$true] %s165
          %171 = dma.hbm_to_vmem [thread:$0]  %s1, 640, %s166, [#allocation6], 128, 128, 8
        $region20: #{tpu_custom_call.1} parent=11 // pred_fallthru
          _
        // Predicated region
        $region21: #{tpu_custom_call.1} parent=11 // pred_check
          %p172 = pneg %p81
        $region22: #{tpu_custom_call.1} parent=11 // pred_check_branch
          %174 = sbr.rel (%p172) target = $region24
        $region23: #{tpu_custom_call.1} parent=11 // pred_region
          %s176 = ssub.s32 640, 640
          %177 = vsyncadd [#allocation6], %s176
          %s178 = sshll.u32 [#allocation7], 4
          %s179 = int_to_ptr.vmem [resolvable:$true] %s178
          %184 = dma.hbm_to_vmem [thread:$0]  %s2, 640, %s179, [#allocation6], 128, 128, 8
        $region24: #{tpu_custom_call.1} parent=11 // pred_fallthru
          _
      $region12: #{tpu_custom_call.1} parent=5 // pred_fallthru
        _
      %p185 = scmp.lt.s32.totalorder %s18, 128
      // Predicated region
      $region25: #{tpu_custom_call.1} parent=5 // pred_check
        %p186 = pneg %p185
      $region26: #{tpu_custom_call.1} parent=5 // pred_check_branch
        %188 = sbr.rel (%p186) target = $region28
      $region27: #{tpu_custom_call.1} parent=5 // pred_region
        // Predicated region
        $region29: #{tpu_custom_call.1} parent=27 // pred_check
          %p189 = pneg %p101
        $region30: #{tpu_custom_call.1} parent=27 // pred_check_branch
          %191 = sbr.rel (%p189) target = $region32
        $region31: #{tpu_custom_call.1} parent=27 // pred_region
          %s192 = sand.u32 %s91, 1
          %s193 = scalar_lea.sflag [#allocation9], %s192
          %s194 = sand.u32 %s91, 1
          %s195 = smul.addr %s194, 40
          %s196 = scalar_lea.vmem [#allocation8], %s195
          %s198 = ssub.s32 640, 640
          %199 = vsyncadd %s193, %s198
          %s200 = smul.addr %s18, 5
          %s201 = smul.addr %s200, 128
          %s202 = scalar_lea.hbm %s3, %s201
          %s203 = sshll.u32 %s196, 4
          %s204 = int_to_ptr.vmem [resolvable:$true] %s203
          %209 = dma.hbm_to_vmem [thread:$0]  %s202, 640, %s204, %s193, 128, 128, 8
        $region32: #{tpu_custom_call.1} parent=27 // pred_fallthru
          _
      $region28: #{tpu_custom_call.1} parent=5 // pred_fallthru
        _
      %p210 = scmp.le.s32.totalorder 1, %s18
      %p211 = scmp.lt.s32.totalorder %s18, 129
      %p212 = pnand %p210, %p211
      %p213 = pneg %p212
      // Predicated region
      $region33: #{tpu_custom_call.1} parent=5 // pred_check
        _
      $region34: #{tpu_custom_call.1} parent=5 // pred_check_branch
        %215 = sbr.rel (%p212) target = $region36
      $region35: #{tpu_custom_call.1} parent=5 // pred_region
        %s216 = ssub.s32 %s18, 1
        // Predicated region
        $region37: #{tpu_custom_call.1} parent=35 // pred_check
          %p217 = pneg %p39
        $region38: #{tpu_custom_call.1} parent=35 // pred_check_branch
          %219 = sbr.rel (%p217) target = $region40
        $region39: #{tpu_custom_call.1} parent=35 // pred_region
          %220 = dma.done [#allocation3], 64
        $region40: #{tpu_custom_call.1} parent=35 // pred_fallthru
          _
        // Predicated region
        $region41: #{tpu_custom_call.1} parent=35 // pred_check
          %p221 = pneg %p60
        $region42: #{tpu_custom_call.1} parent=35 // pred_check_branch
          %223 = sbr.rel (%p221) target = $region44
        $region43: #{tpu_custom_call.1} parent=35 // pred_region
          %224 = dma.done [#allocation6], 640
        $region44: #{tpu_custom_call.1} parent=35 // pred_fallthru
          _
        // Predicated region
        $region45: #{tpu_custom_call.1} parent=35 // pred_check
          %p225 = pneg %p81
        $region46: #{tpu_custom_call.1} parent=35 // pred_check_branch
          %227 = sbr.rel (%p225) target = $region48
        $region47: #{tpu_custom_call.1} parent=35 // pred_region
          %228 = dma.done [#allocation6], 640
        $region48: #{tpu_custom_call.1} parent=35 // pred_fallthru
          _
        %s229 = sand.u32 %s94, 1
        %s230 = scalar_lea.sflag [#allocation9], %s229
        %s231 = sand.u32 %s94, 1
        %s232 = smul.addr %s231, 40
        %s233 = scalar_lea.vmem [#allocation8], %s232
        // Predicated region
        $region49: #{tpu_custom_call.1} parent=35 // pred_check
          %p234 = pneg %p107
        $region50: #{tpu_custom_call.1} parent=35 // pred_check_branch
          %236 = sbr.rel (%p234) target = $region52
        $region51: #{tpu_custom_call.1} parent=35 // pred_region
          %237 = dma.done %s230, 640
        $region52: #{tpu_custom_call.1} parent=35 // pred_fallthru
          _
        %p238 = pneg %p39
        %p239 = pneg %p36
        %p240 = pneg %p60
        %p241 = pneg %p57
        %p242 = pneg %p81
        %p243 = pneg %p78
        %s244 = sand.u32 %s94, 1
        %s245 = scalar_lea.sflag [#allocation9], %s244
        %s246 = sand.u32 %s94, 1
        %s247 = smul.addr %s246, 40
        %s248 = scalar_lea.vmem [#allocation8], %s247
        %p249 = pneg %p107
        %p250 = pneg %p104
        %p251 = pneg %p133
        %p252 = pneg %p130
        %s253 = sand.u32 %s120, 1
        %s254 = scalar_lea.sflag [#allocation4], %s253
        %s255 = sand.u32 %s120, 1
        %s256 = smul.addr %s255, 4
        %s257 = scalar_lea.vmem [#allocation10], %s256
        %v258 = vld [vmem:[#allocation5] sm:$0xff]
        %v259 = vld [vmem:[#allocation5 + $0x8] sm:$0xff]
        %v260 = vld [vmem:[#allocation5 + $0x10] sm:$0xff]
        %v261 = vld [vmem:[#allocation5 + $0x18] sm:$0xff]
        %v262 = vld [vmem:[#allocation5 + $0x20] sm:$0xff]
        %v263 = vld [vmem:[#allocation7] sm:$0xff]
        %v264 = vld [vmem:[#allocation7 + $0x8] sm:$0xff]
        %v265 = vld [vmem:[#allocation7 + $0x10] sm:$0xff]
        %v266 = vld [vmem:[#allocation7 + $0x18] sm:$0xff]
        %v267 = vld [vmem:[#allocation7 + $0x20] sm:$0xff]
        %v268 = vld [vmem:[%s233] sm:$0xff]
        %v269 = vld [vmem:[%s233 + $0x8] sm:$0xff]
        %v270 = vld [vmem:[%s233 + $0x10] sm:$0xff]
        %v271 = vld [vmem:[%s233 + $0x18] sm:$0xff]
        %v272 = vld [vmem:[%s233 + $0x20] sm:$0xff]
        %v273 = vmul.f32 %v263, %v268
        %v274 = vmul.f32 %v264, %v269
        %v275 = vmul.f32 %v265, %v270
        %v276 = vmul.f32 %v266, %v271
        %v277 = vmul.f32 %v267, %v272
        %v278 = vadd.f32 %v258, %v273
        %v279 = vadd.f32 %v259, %v274
        %v280 = vadd.f32 %v260, %v275
        %v281 = vadd.f32 %v261, %v276
        %v282 = vadd.f32 %v262, %v277
        %v283 = vld [vmem:[#allocation2] sm:$0xf]
        %vm284 = vcmask 326656
        %v286 = vsel %vm284, %v283, 0
        %288 = vmatprep.subr.mxu0 0.0
        %289 = vmatpush1.msra.mxu0 %v278
        %290 = vmatprep.subr.mxu0 0.0
        %291 = vmatpush1.msra.mxu0 %v279
        %292 = vmatprep.subr.mxu0 0.0
        %293 = vmatpush1.msra.mxu0 %v280
        %294 = vmatprep.subr.mxu0 0.0
        %295 = vmatpush1.msra.mxu0 %v281
        %296 = vmatprep.subr.mxu0 0.0
        %297 = vmatpush1.msra.mxu0 %v282
        %298 = vmatprep.subr.mxu0 0.0
        %299 = vmatpush1.msra.mxu0 0.0
        %300 = vmatprep.subr.mxu0 0.0
        %301 = vmatpush1.msra.mxu0 0.0
        %302 = vmatprep.subr.mxu0 0.0
        %303 = vmatpush1.msra.mxu0 0.0
        %304 = vmatprep.subr.mxu0 0.0
        %305 = vmatpush1.msra.mxu0 0.0
        %306 = vmatprep.subr.mxu0 0.0
        %307 = vmatpush1.msra.mxu0 0.0
        %308 = vmatprep.subr.mxu0 0.0
        %309 = vmatpush1.msra.mxu0 0.0
        %310 = vmatprep.subr.mxu0 0.0
        %311 = vmatpush1.msra.mxu0 0.0
        %312 = vmatprep.subr.mxu0 0.0
        %313 = vmatpush1.msra.mxu0 0.0
        %314 = vmatprep.subr.mxu0 0.0
        %315 = vmatpush1.msra.mxu0 0.0
        %316 = vmatprep.subr.mxu0 0.0
        %317 = vmatpush1.msra.mxu0 0.0
        %318 = vmatprep.subr.mxu0 0.0
        %319 = vmatpush1.msra.mxu0 0.0
        %320 = vmatprep.subr.mxu0 0.0
        %321 = vmatpush1.msra.mxu0 0.0
        %322 = vmatprep.subr.mxu0 0.0
        %323 = vmatpush1.msra.mxu0 0.0
        %324 = vmatprep.subr.mxu0 0.0
        %325 = vmatpush1.msra.mxu0 0.0
        %326 = vmatprep.subr.mxu0 0.0
        %327 = vmatpush1.msra.mxu0 0.0
        %328 = vmatprep.subr.mxu0 0.0
        %329 = vmatpush1.msra.mxu0 0.0
        %330 = vmatprep.subr.mxu0 0.0
        %331 = vmatpush1.msra.mxu0 0.0
        %332 = vmatprep.subr.mxu0 0.0
        %333 = vmatpush1.msra.mxu0 0.0
        %334 = vmatprep.subr.mxu0 0.0
        %335 = vmatpush1.msra.mxu0 0.0
        %336 = vmatprep.subr.mxu0 0.0
        %337 = vmatpush1.msra.mxu0 0.0
        %338 = vmatprep.subr.mxu0 0.0
        %339 = vmatpush1.msra.mxu0 0.0
        %340 = vmatprep.subr.mxu0 0.0
        %341 = vmatpush1.msra.mxu0 0.0
        %342 = vmatprep.subr.mxu0 0.0
        %343 = vmatpush1.msra.mxu0 0.0
        %344 = vmatprep.subr.mxu0 0.0
        %345 = vmatpush1.msra.mxu0 0.0
        %346 = vmatprep.subr.mxu0 0.0
        %347 = vmatpush1.msra.mxu0 0.0
        %348 = vmatprep.subr.mxu0 0.0
        %349 = vmatpush1.msra.mxu0 0.0
        %350 = vmatprep.subr.mxu0 0.0
        %351 = vmatpush1.msra.mxu0 0.0
        %352 = vmatprep.mubr.f32.mxu0 0.0
        %353 = vmatmul.mubr.f32.gmra.mrb[0].mxu0 %v286
        %v354 = vpop.f32.mrb[0].mxu0
        %v355 = vadd.f32 0.0, %v354
        %v356 = vpop.f32.mrb[0].mxu0
        %357 = vdwg.mxu0
        %358 = vst [vmem:[%s257] sm:$0xf] %v355
        %s359 = sand.u32 %s120, 1
        %s360 = scalar_lea.sflag [#allocation4], %s359
        %s361 = sand.u32 %s120, 1
        %s362 = smul.addr %s361, 4
        %s363 = scalar_lea.vmem [#allocation10], %s362
        // Predicated region
        $region53: #{tpu_custom_call.1} parent=35 // pred_check
          %p364 = pneg %p130
        $region54: #{tpu_custom_call.1} parent=35 // pred_check_branch
          %366 = sbr.rel (%p364) target = $region56
        $region55: #{tpu_custom_call.1} parent=35 // pred_region
          %s368 = ssub.s32 64, 64
          %369 = vsyncadd %s360, %s368
          %s370 = smul.addr %s23, 64
          %s371 = scalar_lea.hbm %s4, %s370
          %s373 = sshll.u32 %s363, 4
          %s374 = int_to_ptr.vmem [resolvable:$true] %s373
          %376 = dma.vmem_to_hbm [thread:$0]  %s374, 64, %s371, %s360
        $region56: #{tpu_custom_call.1} parent=35 // pred_fallthru
          _
      $region36: #{tpu_custom_call.1} parent=5 // pred_fallthru
        _
      %p377 = scmp.le.s32.totalorder 2, %s18
      // Predicated region
      $region57: #{tpu_custom_call.1} parent=5 // pred_check
        %p378 = pneg %p377
      $region58: #{tpu_custom_call.1} parent=5 // pred_check_branch
        %380 = sbr.rel (%p378) target = $region60
      $region59: #{tpu_custom_call.1} parent=5 // pred_region
        %s381 = ssub.s32 %s18, 2
        // Predicated region
        $region61: #{tpu_custom_call.1} parent=59 // pred_check
          %p382 = pneg %p136
        $region62: #{tpu_custom_call.1} parent=59 // pred_check_branch
          %384 = sbr.rel (%p382) target = $region64
        $region63: #{tpu_custom_call.1} parent=59 // pred_region
          %s385 = sand.u32 %s121, 1
          %s386 = scalar_lea.sflag [#allocation4], %s385
          %s387 = sand.u32 %s121, 1
          %s388 = smul.addr %s387, 4
          %s389 = scalar_lea.vmem [#allocation10], %s388
          %390 = dma.done %s386, 64
        $region64: #{tpu_custom_call.1} parent=59 // pred_fallthru
          _
      $region60: #{tpu_custom_call.1} parent=5 // pred_fallthru
        _
    $region6: #{tpu_custom_call.1} parent=1 // loop_footer
      %s22 = sadd.s32 1, %s18
    $region7: #{tpu_custom_call.1} parent=1 // loop_footer_branch
      %17 = sbr.rel target = $region3
    $region8: #{tpu_custom_call.1} parent=1 // loop_exit
      _
    %391 = vsyncpa [#allocation3], 1
    %s392 = scalar_lea.sflag [#allocation3], 1
    %393 = vsyncpa %s392, 1
    %394 = vsyncpa [#allocation6], 1
    %395 = vsyncpa [#allocation9], 1
    %s396 = scalar_lea.sflag [#allocation9], 1
    %397 = vsyncpa %s396, 1
    %398 = vsyncpa [#allocation4], 1
    %s399 = scalar_lea.sflag [#allocation4], 1
    %400 = vsyncpa %s399, 1

</llo_original>
